<compile_context>
chip_gen: v6e
topology: v6e:2x2x1
jax: 0.10.0
libtpu: 0.0.40
codegen_flags: <defaults>
</compile_context>

<pallas_src>
import math

import numpy as np
import jax
import jax.numpy as jnp
from jax.experimental import pallas as pl
from jax.experimental.pallas import tpu as pltpu


# ----------------------------- parameter setup -----------------------------
def transition(N):
    """HiPPO-LegT continuous-time transition matrices (float64 numpy)."""
    Q = np.arange(N, dtype=np.float64)
    R = (2 * Q + 1)[:, None]
    j, i = np.meshgrid(Q, Q)
    A = np.where(i < j, -1, (-1.0) ** (i - j + 1)) * R
    B = (-1.0) ** Q[:, None] * R
    return A, B


def bilinear_discretize(A, B, dt):
    """scipy.signal.cont2discrete(..., method='bilinear') for (A, B) only."""
    N = A.shape[0]
    I = np.eye(N)
    M1 = I - (dt / 2.0) * A
    Ad = np.linalg.solve(M1, I + (dt / 2.0) * A)
    Bd = np.linalg.solve(M1, dt * B)
    return Ad, Bd


def make_hippo_legt_params(N, dt=1.0):
    A, B = transition(N)
    Ad, Bd = bilinear_discretize(A, B, dt)
    Bd = Bd.squeeze(-1)  # (N,)
    # TODO(synk): eval_matrix (Legendre reconstruction) only feeds .reconstruct(),
    # which is not part of forward(); omitted here.
    return Ad, Bd        # float64 numpy


def make_chunk_operators(Ad, Bd, T):
    """Host-side (float64) chunk operators for the scan-to-matmul form.

    For a chunk of T timesteps with inputs f (M, T) and entering state c0 (M, N):
        c_i = c0 @ (A^T)^(i+1) + sum_{j<=i} f[:, j] * (B @ (A^T)^(i-j))
    =>  out (M, T*N)  = c0 @ Ppow + f @ W
        c_{T-1} (M,N) = c0 @ Plast + f @ Wlast
    """
    N = Ad.shape[0]
    At = Ad.T
    P = [np.eye(N, dtype=np.float64)]
    for _ in range(T):
        P.append(P[-1] @ At)                               # P[k] = (A^T)^k
    BP = np.stack([Bd @ P[k] for k in range(T)])           # (T, N)

    Ppow = np.concatenate(P[1:T + 1], axis=1)              # (N, T*N)
    W = np.zeros((T, T * N), dtype=np.float64)
    for i in range(T):
        for j in range(i + 1):
            W[j, i * N:(i + 1) * N] = BP[i - j]
    Plast = P[T]                                           # (N, N)
    Wlast = W[:, (T - 1) * N:]                             # (T, N)
    return (jnp.asarray(Ppow, jnp.float32), jnp.asarray(W, jnp.float32),
            jnp.asarray(Plast, jnp.float32), jnp.asarray(Wlast, jnp.float32))


# ------------------------------ tiling helpers ------------------------------
def _round_up(a, b):
    return ((a + b - 1) // b) * b


def _pick_time_chunk(L, N):
    """Timesteps per grid step.

    Single chunk covering the (padded) sequence when it is short; otherwise
    T = 128 so both the (TM, T) input block and the (TM, T*N) output block are
    lane-dense multiples of 128."""
    lcm = 128 // math.gcd(N, 128)          # smallest T with (T * N) % 128 == 0
    single = _round_up(max(L, 1), lcm)
    if single <= 128:
        return single
    return 128


def _pick_m_tile(Mp, T, N):
    """Mp is a multiple of 8 (or < 8).  Prefer >= 2 m-blocks so the 'parallel'
    grid axis actually shards across v7x's two TensorCores, keep the (TM, T*N)
    output block <= ~8 MiB per buffer, and cap TM at 512."""
    if Mp <= 8:
        return Mp
    max_tm = min(512, max(8, (8 * 1024 * 1024) // (4 * T * N)))
    limit = max(8, min(Mp // 2, (max_tm // 8) * 8))
    best = 8                                # 8 always divides Mp (multiple of 8)
    for tm in range(8, limit + 1, 8):
        if Mp % tm == 0:
            best = tm
    return best


def _f32_block_bytes(rows, cols):
    """VMEM footprint of one f32 (rows, cols) buffer, (8,128) lane-padded."""
    return _round_up(rows, 8) * _round_up(cols, 128) * 4


# --------------------------------- kernel ----------------------------------
def hippo_kernel(x_ref, ppow_ref, w_ref, plast_ref, wlast_ref, out_ref, c_ref):
    """One (m, t) grid step = T timesteps for TM rows of M = B*D.

    x_ref     : (TM, T)     input chunk
    ppow_ref  : (N, T*N)    powers of A^T (VMEM-resident)
    w_ref     : (T, T*N)    causal input kernel with B folded in (resident)
    plast_ref : (N, N)      (A^T)^T (resident)
    wlast_ref : (T, N)      last column-block of W (resident)
    out_ref   : (TM, T*N)   out[:, i*N:(i+1)*N] = c at global step t*T + i
    c_ref     : (TM, N)     carried state (scratch, persists across t)

    INVARIANT: the time axis must remain the innermost grid axis and c_ref is
    re-initialized at t == 0; otherwise state leaks across m-blocks.
    """
    t = pl.program_id(1)

    @pl.when(t == 0)
    def _init():
        c_ref[...] = jnp.zeros_like(c_ref)

    f = x_ref[...]                           # (TM, T)
    c0 = c_ref[...]                          # (TM, N)

    # Whole chunk in two lane-dense MXU matmuls (no serialized per-step chain).
    out_ref[...] = (
        jnp.dot(c0, ppow_ref[...], preferred_element_type=jnp.float32)
        + jnp.dot(f, w_ref[...], preferred_element_type=jnp.float32)
    ).astype(out_ref.dtype)

    # State entering the next chunk (skipped on the last chunk).
    @pl.when(t + 1 < pl.num_programs(1))
    def _carry():
        c_ref[...] = (
            jnp.dot(c0, plast_ref[...], preferred_element_type=jnp.float32)
            + jnp.dot(f, wlast_ref[...], preferred_element_type=jnp.float32))


def hippo_legt_forward(x, Ad, Bd):
    """x: (B, D, L) float32; Ad (N,N) / Bd (N,) are the discretized HiPPO
    matrices as float64 numpy arrays.  Returns (L, B, D, N) float32."""
    Bsz, D, L = x.shape
    N = Ad.shape[0]
    M = Bsz * D

    T = _pick_time_chunk(L, N)
    L_pad = _round_up(L, T)
    M_pad = _round_up(M, 8)
    TM = _pick_m_tile(M_pad, T, N)
    num_t = L_pad // T
    num_m = M_pad // TM
    assert L_pad % T == 0 and M_pad % TM == 0

    # Host-side float64 precompute (B folded into W / Wlast), cast to f32.
    Ppow, W, Plast, Wlast = make_chunk_operators(Ad, Bd, T)

    xf = x.reshape(M, L).astype(jnp.float32)
    if M_pad != M or L_pad != L:
        xf = jnp.pad(xf, ((0, M_pad - M), (0, L_pad - L)))   # zero-pad, tail dropped

    # VMEM budget: double-buffered blocks + residents + carried-state scratch.
    budget = (2 * _f32_block_bytes(TM, T)
              + 2 * _f32_block_bytes(N, T * N)
              + 2 * _f32_block_bytes(T, T * N)
              + 2 * _f32_block_bytes(N, N)
              + 2 * _f32_block_bytes(T, N)
              + 2 * _f32_block_bytes(TM, T * N)
              + _f32_block_bytes(TM, N))
    vmem_limit = min(max(32 * 1024 * 1024, int(1.25 * budget)), 64 * 1024 * 1024)

    out = pl.pallas_call(
        hippo_kernel,
        out_shape=jax.ShapeDtypeStruct((M_pad, L_pad * N), jnp.float32),
        grid_spec=pltpu.PrefetchScalarGridSpec(
            num_scalar_prefetch=0,
            grid=(num_m, num_t),                 # t innermost: sequential recurrence
            in_specs=[
                pl.BlockSpec((TM, T), lambda m, t: (m, t)),       # f chunk
                pl.BlockSpec((N, T * N), lambda m, t: (0, 0)),    # Ppow (resident)
                pl.BlockSpec((T, T * N), lambda m, t: (0, 0)),    # W (resident)
                pl.BlockSpec((N, N), lambda m, t: (0, 0)),        # Plast (resident)
                pl.BlockSpec((T, N), lambda m, t: (0, 0)),        # Wlast (resident)
            ],
            out_specs=pl.BlockSpec((TM, T * N), lambda m, t: (m, t)),
            scratch_shapes=[pltpu.VMEM((TM, N), jnp.float32)],    # carried state
        ),
        compiler_params=pltpu.CompilerParams(
            dimension_semantics=("parallel", "arbitrary"),
            vmem_limit_bytes=vmem_limit),
    )(xf, Ppow, W, Plast, Wlast)

    # (M_pad, L_pad*N) -> (L, B, D, N); one wrapper-side transpose of the output.
    out = out.reshape(M_pad, L_pad, N)[:M, :L]
    out = jnp.transpose(out, (1, 0, 2)).reshape(L, Bsz, D, N)
    return out


# ------------------------------ JAX reference -------------------------------
def hippo_legt_reference(x, A, Bvec):
    Bsz, D, L = x.shape
    N = A.shape[0]
    xs = jnp.transpose(x, (2, 0, 1))                      # (L, B, D)

    def step(c, f):
        c = c @ A.T + f[..., None] * Bvec
        return c, c

    c0 = jnp.zeros((Bsz, D, N), jnp.float32)
    _, cs = jax.lax.scan(step, c0, xs)
    return cs                                             # (L, B, D, N)


# ---------------------------------- main ------------------------------------
if __name__ == "__main__":
    Bsz, D, L, N = 2, 4, 8, 32
    key = jax.random.PRNGKey(0)
    x = jax.random.normal(key, (Bsz, D, L), dtype=jnp.float32)

    Ad, Bd = make_hippo_legt_params(N, dt=1.0)            # float64 numpy

    out = jax.block_until_ready(hippo_legt_forward(x, Ad, Bd))
    ref = jax.block_until_ready(
        hippo_legt_reference(x, jnp.asarray(Ad, jnp.float32),
                             jnp.asarray(Bd, jnp.float32)))

    assert out.shape == (L, Bsz, D, N), out.shape
    # The chunked (scan-to-matmul) form changes summation order slightly vs the
    # step-by-step reference, so allow ~1e-3 rather than bit-exactness.
    np.testing.assert_allclose(np.asarray(out), np.asarray(ref),
                               rtol=1e-3, atol=1e-3)
    print("KERNEL_OK")
</pallas_src>

<mosaic_0001>
module attributes {stable_mosaic.version = 11 : i64} {
  func.func @hippo_kernel(%arg0: i32, %arg1: i32, %arg2: memref<8x8xf32, #tpu.memory_space<vmem>>, %arg3: memref<32x256xf32, #tpu.memory_space<vmem>>, %arg4: memref<8x256xf32, #tpu.memory_space<vmem>>, %arg5: memref<32x32xf32, #tpu.memory_space<vmem>>, %arg6: memref<8x32xf32, #tpu.memory_space<vmem>>, %arg7: memref<8x256xf32, #tpu.memory_space<vmem>>, %arg8: memref<8x32xf32, #tpu.memory_space<vmem>>) attributes {dimension_semantics = [#tpu.dimension_semantics<parallel>, #tpu.dimension_semantics<arbitrary>], iteration_bounds = array<i64: 1, 1>, scalar_prefetch = 0 : i64, scratch_operands = 1 : i64, tpu.core_type = #tpu.core_type<tc>, window_params = [{transform_indices = @transform_0, window_bounds = array<i64: 8, 8>}, {pipeline_mode = #tpu.pipeline_mode<synchronous>, transform_indices = @transform_1, window_bounds = array<i64: 32, 256>}, {pipeline_mode = #tpu.pipeline_mode<synchronous>, transform_indices = @transform_2, window_bounds = array<i64: 8, 256>}, {pipeline_mode = #tpu.pipeline_mode<synchronous>, transform_indices = @transform_3, window_bounds = array<i64: 32, 32>}, {pipeline_mode = #tpu.pipeline_mode<synchronous>, transform_indices = @transform_4, window_bounds = array<i64: 8, 32>}, {transform_indices = @transform_5, window_bounds = array<i64: 8, 256>}]} {
    %c0_i32 = arith.constant 0 : i32
    %0 = arith.cmpi eq, %arg1, %c0_i32 : i32
    %1 = arith.extui %0 : i1 to i32
    %c0_i32_0 = arith.constant 0 : i32
    %2 = arith.cmpi ne, %1, %c0_i32_0 : i32
    scf.if %2 {
      %cst_13 = arith.constant 0.000000e+00 : f32
      %15 = vector.broadcast %cst_13 : f32 to vector<8x32xf32>
      %c0_14 = arith.constant 0 : index
      %c0_15 = arith.constant 0 : index
      %16 = vector.load %arg8[%c0_14, %c0_15] : memref<8x32xf32, #tpu.memory_space<vmem>>, vector<8x32xf32>
      tpu.vector_store %arg8[%c0_14, %c0_15], %15 {strides = array<i32>} : memref<8x32xf32, #tpu.memory_space<vmem>>, vector<8x32xf32>,
    } else {
    }
    %c0 = arith.constant 0 : index
    %c0_1 = arith.constant 0 : index
    %3 = vector.load %arg2[%c0, %c0_1] : memref<8x8xf32, #tpu.memory_space<vmem>>, vector<8x8xf32>
    %c0_2 = arith.constant 0 : index
    %c0_3 = arith.constant 0 : index
    %4 = vector.load %arg8[%c0_2, %c0_3] : memref<8x32xf32, #tpu.memory_space<vmem>>, vector<8x32xf32>
    %c0_4 = arith.constant 0 : index
    %c0_5 = arith.constant 0 : index
    %5 = vector.load %arg3[%c0_4, %c0_5] : memref<32x256xf32, #tpu.memory_space<vmem>>, vector<32x256xf32>
    %cst = arith.constant dense<0.000000e+00> : vector<8x256xf32>
    %6 = tpu.matmul %4, %5, %cst {dimension_numbers = #tpu.dot_dimension_numbers<[1], [0], [0], [1], [0, 0, 1, 1], [], []>} : vector<8x32xf32>, vector<32x256xf32>, vector<8x256xf32> -> vector<8x256xf32>
    %c0_6 = arith.constant 0 : index
    %c0_7 = arith.constant 0 : index
    %7 = vector.load %arg4[%c0_6, %c0_7] : memref<8x256xf32, #tpu.memory_space<vmem>>, vector<8x256xf32>
    %cst_8 = arith.constant dense<0.000000e+00> : vector<8x256xf32>
    %8 = tpu.matmul %3, %7, %cst_8 {dimension_numbers = #tpu.dot_dimension_numbers<[1], [0], [0], [1], [0, 0, 1, 1], [], []>} : vector<8x8xf32>, vector<8x256xf32>, vector<8x256xf32> -> vector<8x256xf32>
    %9 = arith.addf %6, %8 : vector<8x256xf32>
    %c0_9 = arith.constant 0 : index
    %c0_10 = arith.constant 0 : index
    %10 = vector.load %arg7[%c0_9, %c0_10] : memref<8x256xf32, #tpu.memory_space<vmem>>, vector<8x256xf32>
    tpu.vector_store %arg7[%c0_9, %c0_10], %9 {strides = array<i32>} : memref<8x256xf32, #tpu.memory_space<vmem>>, vector<8x256xf32>,
    %c1_i32 = arith.constant 1 : i32
    %11 = arith.addi %arg1, %c1_i32 : i32
    %c1_i32_11 = arith.constant 1 : i32
    %12 = arith.cmpi slt, %11, %c1_i32_11 : i32
    %13 = arith.extui %12 : i1 to i32
    %c0_i32_12 = arith.constant 0 : i32
    %14 = arith.cmpi ne, %13, %c0_i32_12 : i32
    scf.if %14 {
      %c0_13 = arith.constant 0 : index
      %c0_14 = arith.constant 0 : index
      %15 = vector.load %arg5[%c0_13, %c0_14] : memref<32x32xf32, #tpu.memory_space<vmem>>, vector<32x32xf32>
      %cst_15 = arith.constant dense<0.000000e+00> : vector<8x32xf32>
      %16 = tpu.matmul %4, %15, %cst_15 {dimension_numbers = #tpu.dot_dimension_numbers<[1], [0], [0], [1], [0, 0, 1, 1], [], []>} : vector<8x32xf32>, vector<32x32xf32>, vector<8x32xf32> -> vector<8x32xf32>
      %c0_16 = arith.constant 0 : index
      %c0_17 = arith.constant 0 : index
      %17 = vector.load %arg6[%c0_16, %c0_17] : memref<8x32xf32, #tpu.memory_space<vmem>>, vector<8x32xf32>
      %cst_18 = arith.constant dense<0.000000e+00> : vector<8x32xf32>
      %18 = tpu.matmul %3, %17, %cst_18 {dimension_numbers = #tpu.dot_dimension_numbers<[1], [0], [0], [1], [0, 0, 1, 1], [], []>} : vector<8x8xf32>, vector<8x32xf32>, vector<8x32xf32> -> vector<8x32xf32>
      %19 = arith.addf %16, %18 : vector<8x32xf32>
      %c0_19 = arith.constant 0 : index
      %c0_20 = arith.constant 0 : index
      %20 = vector.load %arg8[%c0_19, %c0_20] : memref<8x32xf32, #tpu.memory_space<vmem>>, vector<8x32xf32>
      tpu.vector_store %arg8[%c0_19, %c0_20], %19 {strides = array<i32>} : memref<8x32xf32, #tpu.memory_space<vmem>>, vector<8x32xf32>,
    } else {
    }
    return
  }
  func.func @transform_0(%arg0: i32, %arg1: i32) -> (i32, i32) {
    %c0_i32 = arith.constant 0 : i32
    return %arg0, %arg1 : i32, i32
  }
  func.func @transform_1(%arg0: i32, %arg1: i32) -> (i32, i32) {
    %c0_i32 = arith.constant 0 : i32
    %c0_i32_0 = arith.constant 0 : i32
    %c0_i32_1 = arith.constant 0 : i32
    return %c0_i32, %c0_i32_0 : i32, i32
  }
  func.func @transform_2(%arg0: i32, %arg1: i32) -> (i32, i32) {
    %c0_i32 = arith.constant 0 : i32
    %c0_i32_0 = arith.constant 0 : i32
    %c0_i32_1 = arith.constant 0 : i32
    return %c0_i32, %c0_i32_0 : i32, i32
  }
  func.func @transform_3(%arg0: i32, %arg1: i32) -> (i32, i32) {
    %c0_i32 = arith.constant 0 : i32
    %c0_i32_0 = arith.constant 0 : i32
    %c0_i32_1 = arith.constant 0 : i32
    return %c0_i32, %c0_i32_0 : i32, i32
  }
  func.func @transform_4(%arg0: i32, %arg1: i32) -> (i32, i32) {
    %c0_i32 = arith.constant 0 : i32
    %c0_i32_0 = arith.constant 0 : i32
    %c0_i32_1 = arith.constant 0 : i32
    return %c0_i32, %c0_i32_0 : i32, i32
  }
  func.func @transform_5(%arg0: i32, %arg1: i32) -> (i32, i32) {
    %c0_i32 = arith.constant 0 : i32
    return %arg0, %arg1 : i32, i32
  }
}

</mosaic_0001>

<llo_original>
// kernel: tpu_custom_call.1
$region0: #{tpu_custom_call.1}
  #allocation0 [shape = 'u32[]', space=smem, size = 0x4, offset = 0x4, fixed_abs, tag = 'smem constant byte address 0x4 - core index']
  #allocation1 [shape = 'u32[144,128]{1,0:T(1,128)}', space=vmem, size = 0x12000, scoped, tag = 'internal scratch']
  #allocation2 [shape = 'f32[8,32]{1,0:T(8,128)}', space=vmem, size = 0x1000, scoped, tag = 'scratch operand']
  %s0 = inlined_call_operand.hbm [shape: f32[8,8], index: 0, kind: input, shape index: {}]
  %s1 = inlined_call_operand.hbm [shape: f32[32,256], index: 1, kind: input, shape index: {}]
  %s2 = inlined_call_operand.hbm [shape: f32[8,256], index: 2, kind: input, shape index: {}]
  %s3 = inlined_call_operand.hbm [shape: f32[32,32], index: 3, kind: input, shape index: {}]
  %s4 = inlined_call_operand.hbm [shape: f32[8,32], index: 4, kind: input, shape index: {}]
  %s5 = inlined_call_operand.hbm [shape: f32[8,256], index: 5, kind: output, shape index: {}]
  %s6 = sld [smem:[#allocation0]]
  $region58: #{tpu_custom_call.1} parent=0
    _
  %s8 = ssub.s32 1, %s6
  %s9 = scalar_select 0, %s8, %s6
  $region1: #{tpu_custom_call.1} parent=0
    #allocation3 [shape = 'u8[4096]{0}', space=vmem, size = 0x1000, scoped, tag = 'input window, operand 0, single buffered']
    #allocation4 [shape = 's32[1]{0}', space=sflag, size = 0x4, scoped, tag = 'scoped memory for tpu_custom_call.1']
    #allocation5 [shape = 's32[1]{0}', space=sflag, size = 0x4, scoped, tag = 'scoped memory for tpu_custom_call.1']
    #allocation6 [shape = 'u8[32768]{0}', space=vmem, size = 0x8000, scoped, tag = 'input window, operand 1, single buffered']
    #allocation7 [shape = 's32[1]{0}', space=sflag, size = 0x4, scoped, tag = 'scoped memory for tpu_custom_call.1']
    #allocation8 [shape = 'u8[8192]{0}', space=vmem, size = 0x2000, scoped, tag = 'input window, operand 2, single buffered']
    #allocation9 [shape = 'u8[16384]{0}', space=vmem, size = 0x4000, scoped, tag = 'input window, operand 3, single buffered']
    #allocation10 [shape = 's32[1]{0}', space=sflag, size = 0x4, scoped, tag = 'scoped memory for tpu_custom_call.1']
    #allocation11 [shape = 'u8[4096]{0}', space=vmem, size = 0x1000, scoped, tag = 'input window, operand 4, single buffered']
    #allocation12 [shape = 'u8[8192]{0}', space=vmem, size = 0x2000, scoped, tag = 'output window, operand 0, single buffered']
    %10 = vsyncpa [#allocation4], 0
    %11 = vsyncpa [#allocation7], 0
    %12 = vsyncpa [#allocation10], 0
    %13 = vsyncpa [#allocation5], 0
    // Predicated region
    $region2: #{tpu_custom_call.1} parent=1 // pred_check
      _
    $region3: #{tpu_custom_call.1} parent=1 // pred_check_branch
      %15 = sbr.rel (0) target = $region5
    $region4: #{tpu_custom_call.1} parent=1 // pred_region
      %s17 = ssub.s32 128, 128
      %18 = vsyncadd [#allocation4], %s17
      %s20 = sshll.u32 [#allocation3], 4
      %s21 = int_to_ptr.vmem [resolvable:$true] %s20
      %23 = dma.hbm_to_vmem [thread:$0]  %s0, 128, %s21, [#allocation4]
    $region5: #{tpu_custom_call.1} parent=1 // pred_fallthru
      _
    // Predicated region
    $region6: #{tpu_custom_call.1} parent=1 // pred_check
      _
    $region7: #{tpu_custom_call.1} parent=1 // pred_check_branch
      %25 = sbr.rel (0) target = $region9
    $region8: #{tpu_custom_call.1} parent=1 // pred_region
      %s27 = ssub.s32 1024, 1024
      %28 = vsyncadd [#allocation7], %s27
      %s29 = sshll.u32 [#allocation6], 4
      %s30 = int_to_ptr.vmem [resolvable:$true] %s29
      %35 = dma.hbm_to_vmem [thread:$0]  %s1, 1024, %s30, [#allocation7], 256, 256, 16
    $region9: #{tpu_custom_call.1} parent=1 // pred_fallthru
      _
    // Predicated region
    $region10: #{tpu_custom_call.1} parent=1 // pred_check
      _
    $region11: #{tpu_custom_call.1} parent=1 // pred_check_branch
      %37 = sbr.rel (0) target = $region13
    $region12: #{tpu_custom_call.1} parent=1 // pred_region
      %s39 = ssub.s32 256, 256
      %40 = vsyncadd [#allocation7], %s39
      %s42 = sshll.u32 [#allocation8], 4
      %s43 = int_to_ptr.vmem [resolvable:$true] %s42
      %45 = dma.hbm_to_vmem [thread:$0]  %s2, 256, %s43, [#allocation7]
    $region13: #{tpu_custom_call.1} parent=1 // pred_fallthru
      _
    // Predicated region
    $region14: #{tpu_custom_call.1} parent=1 // pred_check
      _
    $region15: #{tpu_custom_call.1} parent=1 // pred_check_branch
      %47 = sbr.rel (0) target = $region17
    $region16: #{tpu_custom_call.1} parent=1 // pred_region
      %s49 = ssub.s32 512, 512
      %50 = vsyncadd [#allocation10], %s49
      %s51 = sshll.u32 [#allocation9], 4
      %s52 = int_to_ptr.vmem [resolvable:$true] %s51
      %57 = dma.hbm_to_vmem [thread:$0]  %s3, 512, %s52, [#allocation10], 128, 128, 8
    $region17: #{tpu_custom_call.1} parent=1 // pred_fallthru
      _
    // Predicated region
    $region18: #{tpu_custom_call.1} parent=1 // pred_check
      _
    $region19: #{tpu_custom_call.1} parent=1 // pred_check_branch
      %59 = sbr.rel (0) target = $region21
    $region20: #{tpu_custom_call.1} parent=1 // pred_region
      %s61 = ssub.s32 128, 128
      %62 = vsyncadd [#allocation10], %s61
      %s64 = sshll.u32 [#allocation11], 4
      %s65 = int_to_ptr.vmem [resolvable:$true] %s64
      %67 = dma.hbm_to_vmem [thread:$0]  %s4, 128, %s65, [#allocation10]
    $region21: #{tpu_custom_call.1} parent=1 // pred_fallthru
      _
    // Predicated region
    $region22: #{tpu_custom_call.1} parent=1 // pred_check
      _
    $region23: #{tpu_custom_call.1} parent=1 // pred_check_branch
      %69 = sbr.rel (0) target = $region25
    $region24: #{tpu_custom_call.1} parent=1 // pred_region
      %70 = dma.done [#allocation4], 128
    $region25: #{tpu_custom_call.1} parent=1 // pred_fallthru
      _
    // Predicated region
    $region26: #{tpu_custom_call.1} parent=1 // pred_check
      _
    $region27: #{tpu_custom_call.1} parent=1 // pred_check_branch
      %72 = sbr.rel (0) target = $region29
    $region28: #{tpu_custom_call.1} parent=1 // pred_region
      %73 = dma.done [#allocation7], 1024
    $region29: #{tpu_custom_call.1} parent=1 // pred_fallthru
      _
    // Predicated region
    $region30: #{tpu_custom_call.1} parent=1 // pred_check
      _
    $region31: #{tpu_custom_call.1} parent=1 // pred_check_branch
      %75 = sbr.rel (0) target = $region33
    $region32: #{tpu_custom_call.1} parent=1 // pred_region
      %76 = dma.done [#allocation7], 256
    $region33: #{tpu_custom_call.1} parent=1 // pred_fallthru
      _
    // Predicated region
    $region34: #{tpu_custom_call.1} parent=1 // pred_check
      _
    $region35: #{tpu_custom_call.1} parent=1 // pred_check_branch
      %78 = sbr.rel (0) target = $region37
    $region36: #{tpu_custom_call.1} parent=1 // pred_region
      %79 = dma.done [#allocation10], 512
    $region37: #{tpu_custom_call.1} parent=1 // pred_fallthru
      _
    // Predicated region
    $region38: #{tpu_custom_call.1} parent=1 // pred_check
      _
    $region39: #{tpu_custom_call.1} parent=1 // pred_check_branch
      %81 = sbr.rel (0) target = $region41
    $region40: #{tpu_custom_call.1} parent=1 // pred_region
      %82 = dma.done [#allocation10], 128
    $region41: #{tpu_custom_call.1} parent=1 // pred_fallthru
      _
    %p83 = scmp.eq.s32.totalorder 0, 0
    // Predicated region
    $region42: #{tpu_custom_call.1} parent=1 // pred_check
      %p84 = pneg %p83
    $region43: #{tpu_custom_call.1} parent=1 // pred_check_branch
      %86 = sbr.rel (%p84) target = $region45
    $region44: #{tpu_custom_call.1} parent=1 // pred_region
      %vm87 = vcmask 261120
      %88 = vst.msk [vmem:[#allocation2] sm:$0xff] %vm87, 0.0
    $region45: #{tpu_custom_call.1} parent=1 // pred_fallthru
      _
    %v89 = vld [vmem:[#allocation3] sm:$0xff]
    %v90 = vld [vmem:[#allocation2] sm:$0xff]
    %v91 = vld [vmem:[#allocation6] sm:$0xff]
    %v92 = vld [vmem:[#allocation6 + $0x8] sm:$0xff]
    %v93 = vld [vmem:[#allocation6 + $0x10] sm:$0xff]
    %v94 = vld [vmem:[#allocation6 + $0x18] sm:$0xff]
    %v95 = vld [vmem:[#allocation6 + $0x20] sm:$0xff]
    %v96 = vld [vmem:[#allocation6 + $0x28] sm:$0xff]
    %v97 = vld [vmem:[#allocation6 + $0x30] sm:$0xff]
    %v98 = vld [vmem:[#allocation6 + $0x38] sm:$0xff]
    %v99 = vld [vmem:[#allocation8] sm:$0xff]
    %v100 = vld [vmem:[#allocation8 + $0x8] sm:$0xff]
    %vm101 = vcmask 64512
    %v103 = vsel %vm101, %v89, 0
    %105 = vmatprep.subr.mxu0 0.0
    %106 = vmatpush1.msra.mxu0 0.0
    %107 = vmatprep.subr.mxu0 0.0
    %108 = vmatpush1.msra.mxu0 0.0
    %109 = vmatprep.subr.mxu0 0.0
    %110 = vmatpush1.msra.mxu0 0.0
    %111 = vmatprep.subr.mxu0 0.0
    %112 = vmatpush1.msra.mxu0 0.0
    %113 = vmatprep.subr.mxu0 0.0
    %114 = vmatpush1.msra.mxu0 0.0
    %115 = vmatprep.subr.mxu0 0.0
    %116 = vmatpush1.msra.mxu0 0.0
    %117 = vmatprep.subr.mxu0 0.0
    %118 = vmatpush1.msra.mxu0 0.0
    %119 = vmatprep.subr.mxu0 0.0
    %120 = vmatpush1.msra.mxu0 0.0
    %121 = vmatprep.subr.mxu0 0.0
    %122 = vmatpush1.msra.mxu0 0.0
    %123 = vmatprep.subr.mxu0 0.0
    %124 = vmatpush1.msra.mxu0 0.0
    %125 = vmatprep.subr.mxu0 0.0
    %126 = vmatpush1.msra.mxu0 0.0
    %127 = vmatprep.subr.mxu0 0.0
    %128 = vmatpush1.msra.mxu0 0.0
    %129 = vmatprep.subr.mxu0 0.0
    %130 = vmatpush1.msra.mxu0 0.0
    %131 = vmatprep.subr.mxu0 0.0
    %132 = vmatpush1.msra.mxu0 0.0
    %133 = vmatprep.subr.mxu0 0.0
    %134 = vmatpush1.msra.mxu0 0.0
    %135 = vmatprep.subr.mxu0 %v100
    %136 = vmatpush1.msra.mxu0 %v99
    %137 = vmatprep.subr.mxu0 0.0
    %138 = vmatpush2.msra.mxu0 0.0
    %139 = vmatprep.subr.mxu0 0.0
    %140 = vmatpush2.msra.mxu0 0.0
    %141 = vmatprep.subr.mxu0 0.0
    %142 = vmatpush2.msra.mxu0 0.0
    %143 = vmatprep.subr.mxu0 0.0
    %144 = vmatpush2.msra.mxu0 0.0
    %145 = vmatprep.subr.mxu0 0.0
    %146 = vmatpush2.msra.mxu0 0.0
    %147 = vmatprep.subr.mxu0 0.0
    %148 = vmatpush2.msra.mxu0 0.0
    %149 = vmatprep.subr.mxu0 0.0
    %150 = vmatpush2.msra.mxu0 0.0
    %151 = vmatprep.subr.mxu0 0.0
    %152 = vmatpush2.msra.mxu0 0.0
    %153 = vmatprep.subr.mxu0 0.0
    %154 = vmatpush2.msra.mxu0 0.0
    %155 = vmatprep.subr.mxu0 0.0
    %156 = vmatpush2.msra.mxu0 0.0
    %157 = vmatprep.subr.mxu0 0.0
    %158 = vmatpush2.msra.mxu0 0.0
    %159 = vmatprep.subr.mxu0 0.0
    %160 = vmatpush2.msra.mxu0 0.0
    %161 = vmatprep.subr.mxu0 0.0
    %162 = vmatpush2.msra.mxu0 0.0
    %163 = vmatprep.subr.mxu0 0.0
    %164 = vmatpush2.msra.mxu0 0.0
    %165 = vmatprep.subr.mxu0 0.0
    %166 = vmatpush2.msra.mxu0 0.0
    %167 = vmatprep.subr.mxu0 0.0
    %168 = vmatpush2.msra.mxu0 0.0
    %169 = vmatprep.mubr.f32.mxu0 0.0
    %170 = vmatmul.mubr.f32.gmra.mxu0 %v103
    %v171 = vpop.f32.mrf.mxu0
    %v172 = vadd.f32 0.0, %v171
    %v173 = vpop.f32.mrf.mxu0
    %v174 = vadd.f32 0.0, %v173
    %175 = vdwg.mxu0
    %vm176 = vcmask 261120
    %v178 = vsel %vm176, %v90, 0
    %180 = vmatprep.subr.mxu0 0.0
    %181 = vmatpush1.msra.mxu0 0.0
    %182 = vmatprep.subr.mxu0 0.0
    %183 = vmatpush1.msra.mxu0 0.0
    %184 = vmatprep.subr.mxu0 0.0
    %185 = vmatpush1.msra.mxu0 0.0
    %186 = vmatprep.subr.mxu0 0.0
    %187 = vmatpush1.msra.mxu0 0.0
    %188 = vmatprep.subr.mxu0 0.0
    %189 = vmatpush1.msra.mxu0 0.0
    %190 = vmatprep.subr.mxu0 0.0
    %191 = vmatpush1.msra.mxu0 0.0
    %192 = vmatprep.subr.mxu0 0.0
    %193 = vmatpush1.msra.mxu0 0.0
    %194 = vmatprep.subr.mxu0 0.0
    %195 = vmatpush1.msra.mxu0 0.0
    %196 = vmatprep.subr.mxu0 0.0
    %197 = vmatpush1.msra.mxu0 0.0
    %198 = vmatprep.subr.mxu0 0.0
    %199 = vmatpush1.msra.mxu0 0.0
    %200 = vmatprep.subr.mxu0 0.0
    %201 = vmatpush1.msra.mxu0 0.0
    %202 = vmatprep.subr.mxu0 0.0
    %203 = vmatpush1.msra.mxu0 0.0
    %204 = vmatprep.subr.mxu0 %v98
    %205 = vmatpush1.msra.mxu0 %v97
    %206 = vmatprep.subr.mxu0 %v96
    %207 = vmatpush1.msra.mxu0 %v95
    %208 = vmatprep.subr.mxu0 %v94
    %209 = vmatpush1.msra.mxu0 %v93
    %210 = vmatprep.subr.mxu0 %v92
    %211 = vmatpush1.msra.mxu0 %v91
    %212 = vmatprep.subr.mxu0 0.0
    %213 = vmatpush2.msra.mxu0 0.0
    %214 = vmatprep.subr.mxu0 0.0
    %215 = vmatpush2.msra.mxu0 0.0
    %216 = vmatprep.subr.mxu0 0.0
    %217 = vmatpush2.msra.mxu0 0.0
    %218 = vmatprep.subr.mxu0 0.0
    %219 = vmatpush2.msra.mxu0 0.0
    %220 = vmatprep.subr.mxu0 0.0
    %221 = vmatpush2.msra.mxu0 0.0
    %222 = vmatprep.subr.mxu0 0.0
    %223 = vmatpush2.msra.mxu0 0.0
    %224 = vmatprep.subr.mxu0 0.0
    %225 = vmatpush2.msra.mxu0 0.0
    %226 = vmatprep.subr.mxu0 0.0
    %227 = vmatpush2.msra.mxu0 0.0
    %228 = vmatprep.subr.mxu0 0.0
    %229 = vmatpush2.msra.mxu0 0.0
    %230 = vmatprep.subr.mxu0 0.0
    %231 = vmatpush2.msra.mxu0 0.0
    %232 = vmatprep.subr.mxu0 0.0
    %233 = vmatpush2.msra.mxu0 0.0
    %234 = vmatprep.subr.mxu0 0.0
    %235 = vmatpush2.msra.mxu0 0.0
    %236 = vmatprep.subr.mxu0 0.0
    %237 = vmatpush2.msra.mxu0 0.0
    %238 = vmatprep.subr.mxu0 0.0
    %239 = vmatpush2.msra.mxu0 0.0
    %240 = vmatprep.subr.mxu0 0.0
    %241 = vmatpush2.msra.mxu0 0.0
    %242 = vmatprep.subr.mxu0 0.0
    %243 = vmatpush2.msra.mxu0 0.0
    %244 = vmatprep.mubr.f32.mxu0 0.0
    %245 = vmatmul.mubr.f32.gmra.mxu0 %v178
    %v246 = vpop.f32.mrf.mxu0
    %v247 = vadd.f32 %v172, %v246
    %v248 = vpop.f32.mrf.mxu0
    %v249 = vadd.f32 %v174, %v248
    %250 = vdwg.mxu0
    %251 = vst [vmem:[#allocation12] sm:$0xff] %v247
    %252 = vst [vmem:[#allocation12 + $0x8] sm:$0xff] %v249
    %s253 = sadd.s32 0, 1
    %p254 = scmp.lt.s32.totalorder %s253, 1
    // Predicated region
    $region46: #{tpu_custom_call.1} parent=1 // pred_check
      %p255 = pneg %p254
    $region47: #{tpu_custom_call.1} parent=1 // pred_check_branch
      %257 = sbr.rel (%p255) target = $region49
    $region48: #{tpu_custom_call.1} parent=1 // pred_region
      %v258 = vld [vmem:[#allocation9] sm:$0xff]
      %v259 = vld [vmem:[#allocation9 + $0x8] sm:$0xff]
      %v260 = vld [vmem:[#allocation9 + $0x10] sm:$0xff]
      %v261 = vld [vmem:[#allocation9 + $0x18] sm:$0xff]
      %v262 = vld [vmem:[#allocation11] sm:$0xff]
      %263 = vmatprep.subr.mxu0 0.0
      %264 = vmatpush1.msra.mxu0 0.0
      %265 = vmatprep.subr.mxu0 0.0
      %266 = vmatpush1.msra.mxu0 0.0
      %267 = vmatprep.subr.mxu0 0.0
      %268 = vmatpush1.msra.mxu0 0.0
      %269 = vmatprep.subr.mxu0 0.0
      %270 = vmatpush1.msra.mxu0 0.0
      %271 = vmatprep.subr.mxu0 0.0
      %272 = vmatpush1.msra.mxu0 0.0
      %273 = vmatprep.subr.mxu0 0.0
      %274 = vmatpush1.msra.mxu0 0.0
      %275 = vmatprep.subr.mxu0 0.0
      %276 = vmatpush1.msra.mxu0 0.0
      %277 = vmatprep.subr.mxu0 0.0
      %278 = vmatpush1.msra.mxu0 0.0
      %279 = vmatprep.subr.mxu0 0.0
      %280 = vmatpush1.msra.mxu0 0.0
      %281 = vmatprep.subr.mxu0 0.0
      %282 = vmatpush1.msra.mxu0 0.0
      %283 = vmatprep.subr.mxu0 0.0
      %284 = vmatpush1.msra.mxu0 0.0
      %285 = vmatprep.subr.mxu0 0.0
      %286 = vmatpush1.msra.mxu0 0.0
      %287 = vmatprep.subr.mxu0 0.0
      %288 = vmatpush1.msra.mxu0 0.0
      %289 = vmatprep.subr.mxu0 0.0
      %290 = vmatpush1.msra.mxu0 0.0
      %291 = vmatprep.subr.mxu0 0.0
      %292 = vmatpush1.msra.mxu0 0.0
      %293 = vmatprep.subr.mxu0 0.0
      %294 = vmatpush1.msra.mxu0 %v262
      %295 = vmatprep.subr.mxu0 0.0
      %296 = vmatpush2.msra.mxu0 0.0
      %297 = vmatprep.subr.mxu0 0.0
      %298 = vmatpush2.msra.mxu0 0.0
      %299 = vmatprep.subr.mxu0 0.0
      %300 = vmatpush2.msra.mxu0 0.0
      %301 = vmatprep.subr.mxu0 0.0
      %302 = vmatpush2.msra.mxu0 0.0
      %303 = vmatprep.subr.mxu0 0.0
      %304 = vmatpush2.msra.mxu0 0.0
      %305 = vmatprep.subr.mxu0 0.0
      %306 = vmatpush2.msra.mxu0 0.0
      %307 = vmatprep.subr.mxu0 0.0
      %308 = vmatpush2.msra.mxu0 0.0
      %309 = vmatprep.subr.mxu0 0.0
      %310 = vmatpush2.msra.mxu0 0.0
      %311 = vmatprep.subr.mxu0 0.0
      %312 = vmatpush2.msra.mxu0 0.0
      %313 = vmatprep.subr.mxu0 0.0
      %314 = vmatpush2.msra.mxu0 0.0
      %315 = vmatprep.subr.mxu0 0.0
      %316 = vmatpush2.msra.mxu0 0.0
      %317 = vmatprep.subr.mxu0 0.0
      %318 = vmatpush2.msra.mxu0 0.0
      %319 = vmatprep.subr.mxu0 0.0
      %320 = vmatpush2.msra.mxu0 0.0
      %321 = vmatprep.subr.mxu0 0.0
      %322 = vmatpush2.msra.mxu0 0.0
      %323 = vmatprep.subr.mxu0 0.0
      %324 = vmatpush2.msra.mxu0 0.0
      %325 = vmatprep.subr.mxu0 0.0
      %326 = vmatpush2.msra.mxu0 0.0
      %327 = vmatprep.mubr.f32.mxu0 0.0
      %328 = vmatmul.mubr.f32.gmra.mxu0 %v103
      %v329 = vpop.f32.mrf.mxu0
      %v330 = vadd.f32 0.0, %v329
      %v331 = vpop.f32.mrf.mxu0
      %332 = vdwg.mxu0
      %333 = vmatprep.subr.mxu0 0.0
      %334 = vmatpush1.msra.mxu0 0.0
      %335 = vmatprep.subr.mxu0 0.0
      %336 = vmatpush1.msra.mxu0 0.0
      %337 = vmatprep.subr.mxu0 0.0
      %338 = vmatpush1.msra.mxu0 0.0
      %339 = vmatprep.subr.mxu0 0.0
      %340 = vmatpush1.msra.mxu0 0.0
      %341 = vmatprep.subr.mxu0 0.0
      %342 = vmatpush1.msra.mxu0 0.0
      %343 = vmatprep.subr.mxu0 0.0
      %344 = vmatpush1.msra.mxu0 0.0
      %345 = vmatprep.subr.mxu0 0.0
      %346 = vmatpush1.msra.mxu0 0.0
      %347 = vmatprep.subr.mxu0 0.0
      %348 = vmatpush1.msra.mxu0 0.0
      %349 = vmatprep.subr.mxu0 0.0
      %350 = vmatpush1.msra.mxu0 0.0
      %351 = vmatprep.subr.mxu0 0.0
      %352 = vmatpush1.msra.mxu0 0.0
      %353 = vmatprep.subr.mxu0 0.0
      %354 = vmatpush1.msra.mxu0 0.0
      %355 = vmatprep.subr.mxu0 0.0
      %356 = vmatpush1.msra.mxu0 0.0
      %357 = vmatprep.subr.mxu0 0.0
      %358 = vmatpush1.msra.mxu0 %v261
      %359 = vmatprep.subr.mxu0 0.0
      %360 = vmatpush1.msra.mxu0 %v260
      %361 = vmatprep.subr.mxu0 0.0
      %362 = vmatpush1.msra.mxu0 %v259
      %363 = vmatprep.subr.mxu0 0.0
      %364 = vmatpush1.msra.mxu0 %v258
      %365 = vmatprep.subr.mxu0 0.0
      %366 = vmatpush2.msra.mxu0 0.0
      %367 = vmatprep.subr.mxu0 0.0
      %368 = vmatpush2.msra.mxu0 0.0
      %369 = vmatprep.subr.mxu0 0.0
      %370 = vmatpush2.msra.mxu0 0.0
      %371 = vmatprep.subr.mxu0 0.0
      %372 = vmatpush2.msra.mxu0 0.0
      %373 = vmatprep.subr.mxu0 0.0
      %374 = vmatpush2.msra.mxu0 0.0
      %375 = vmatprep.subr.mxu0 0.0
      %376 = vmatpush2.msra.mxu0 0.0
      %377 = vmatprep.subr.mxu0 0.0
      %378 = vmatpush2.msra.mxu0 0.0
      %379 = vmatprep.subr.mxu0 0.0
      %380 = vmatpush2.msra.mxu0 0.0
      %381 = vmatprep.subr.mxu0 0.0
      %382 = vmatpush2.msra.mxu0 0.0
      %383 = vmatprep.subr.mxu0 0.0
      %384 = vmatpush2.msra.mxu0 0.0
      %385 = vmatprep.subr.mxu0 0.0
      %386 = vmatpush2.msra.mxu0 0.0
      %387 = vmatprep.subr.mxu0 0.0
      %388 = vmatpush2.msra.mxu0 0.0
      %389 = vmatprep.subr.mxu0 0.0
      %390 = vmatpush2.msra.mxu0 0.0
      %391 = vmatprep.subr.mxu0 0.0
      %392 = vmatpush2.msra.mxu0 0.0
      %393 = vmatprep.subr.mxu0 0.0
      %394 = vmatpush2.msra.mxu0 0.0
      %395 = vmatprep.subr.mxu0 0.0
      %396 = vmatpush2.msra.mxu0 0.0
      %397 = vmatprep.mubr.f32.mxu0 0.0
      %398 = vmatmul.mubr.f32.gmra.mxu0 %v178
      %v399 = vpop.f32.mrf.mxu0
      %v400 = vadd.f32 %v330, %v399
      %v401 = vpop.f32.mrf.mxu0
      %402 = vdwg.mxu0
      %403 = vst.msk [vmem:[#allocation2] sm:$0xff] %vm176, %v400
    $region49: #{tpu_custom_call.1} parent=1 // pred_fallthru
      _
    // Predicated region
    $region50: #{tpu_custom_call.1} parent=1 // pred_check
      _
    $region51: #{tpu_custom_call.1} parent=1 // pred_check_branch
      %405 = sbr.rel (0) target = $region53
    $region52: #{tpu_custom_call.1} parent=1 // pred_region
      %s407 = ssub.s32 256, 256
      %408 = vsyncadd [#allocation5], %s407
      %s410 = sshll.u32 [#allocation12], 4
      %s411 = int_to_ptr.vmem [resolvable:$true] %s410
      %413 = dma.vmem_to_hbm [thread:$0]  %s411, 256, %s5, [#allocation5]
    $region53: #{tpu_custom_call.1} parent=1 // pred_fallthru
      _
    // Predicated region
    $region54: #{tpu_custom_call.1} parent=1 // pred_check
      _
    $region55: #{tpu_custom_call.1} parent=1 // pred_check_branch
      %415 = sbr.rel (0) target = $region57
    $region56: #{tpu_custom_call.1} parent=1 // pred_region
      %416 = dma.done [#allocation5], 256
    $region57: #{tpu_custom_call.1} parent=1 // pred_fallthru
      _
    %417 = vsyncpa [#allocation4], 1
    %418 = vsyncpa [#allocation7], 1
    %419 = vsyncpa [#allocation10], 1
    %420 = vsyncpa [#allocation5], 1

</llo_original>
